<compile_context>
chip_gen: v5e
topology: v5e:2x2
jax: 0.10.0
libtpu: 0.0.40
codegen_flags: <defaults>
</compile_context>

<pallas_src>
import functools

import jax
import jax.numpy as jnp
from jax.experimental import pallas as pl
from jax.experimental.pallas import tpu as pltpu


def _round_up(x, m):
    return (x + m - 1) // m * m


# ------------------------------ Pallas kernel ------------------------------ #
def _conv_bn_silu_kernel(x_ref, w_ref, s_ref, b_ref, o_ref, slab_ref, *,
                         k, C1, H, W, Wp, M):
    # x_ref:    (1, C1, Lpad)   bf16  zero-padded image, NCHW, spatial flattened
    # w_ref:    (TCO, k*k*C1)   bf16  weight tile, cols ordered (kh, kw, cin)
    # s_ref:    (TCO, 1)        f32   BN scale  (gamma / sqrt(var+eps))
    # b_ref:    (TCO, 1)        f32   BN bias   (beta - mean*scale)
    # o_ref:    (1, TCO, H*W)   bf16  NCHW output, spatial flattened (lane-dense)
    # slab_ref: (k*k*C1, M)     bf16  VMEM im2col slab, M = H*Wp (junk cols incl.)
    j = pl.program_id(1)

    # Build the im2col slab once per image; reused across all C2 tiles
    # (the j grid axis is sequential / "arbitrary", so this is safe).
    @pl.when(j == 0)
    def _build_slab():
        for ki in range(k):
            for kj in range(k):
                t = ki * k + kj
                start = ki * Wp + kj                          # static offset
                slab_ref[t * C1:(t + 1) * C1, :] = x_ref[0, :, start:start + M]

    # Single fat-K MXU matmul: (TCO, k*k*C1) @ (k*k*C1, M) -> (TCO, M) f32.
    acc = jnp.dot(w_ref[...], slab_ref[...],
                  preferred_element_type=jnp.float32)

    # BN affine in f32 (per-channel, broadcast along lanes) + SiLU.
    y = acc * s_ref[...] + b_ref[...]
    y = y * jax.nn.sigmoid(y)
    y = y.astype(o_ref.dtype)

    # Drop the junk padded-width columns while storing: H row-stores of (TCO, W).
    for h in range(H):
        o_ref[0, :, h * W:(h + 1) * W] = y[:, h * Wp:h * Wp + W]


# -------------------------------- wrapper ----------------------------------- #
def conv_bn_silu(x_nchw, weight, gamma, beta, running_mean, running_var,
                 *, k=3, eps=1e-5):
    """Conv2d(k, s=1, p=k//2, bias=False) + BatchNorm2d(eval) + SiLU.
    NCHW in / NCHW out (bf16)."""
    assert k % 2 == 1, "same-shape output requires an odd kernel size"
    N, C1, H, W = x_nchw.shape
    C2 = weight.shape[0]
    pad = k // 2
    Hp = H + 2 * pad
    # Row pitch padded to a multiple of 8 (keeps the lane tiling of the slab /
    # accumulator tidy); the extra columns are junk, dropped at store time.
    Wp = _round_up(W + 2 * pad, 8)
    M = H * Wp
    Lpad = _round_up(Hp * Wp + (k - 1), 128)   # +slack so every tap slice is in bounds
    KC = k * k * C1
    HW = H * W

    # C2 tiling (no padding at all for small / well-shaped channel counts).
    if C2 <= 256:
        TCO, C2p = C2, C2
    elif C2 % 256 == 0:
        TCO, C2p = 256, C2
    elif C2 % 128 == 0:
        TCO, C2p = 128, C2
    else:
        TCO, C2p = 128, _round_up(C2, 128)
    J = C2p // TCO

    # ---- activation prep: zero-pad spatially, flatten, bf16 (stays NCHW). ----
    xp = jnp.pad(x_nchw, ((0, 0), (0, 0), (pad, pad), (pad, Wp - W - pad)))
    xp = xp.reshape(N, C1, Hp * Wp)
    xp = jnp.pad(xp, ((0, 0), (0, 0), (0, Lpad - Hp * Wp))).astype(jnp.bfloat16)

    # ---- weight / BN prep (BN scale stays f32, applied in the epilogue). ----
    w_t = jnp.transpose(weight, (0, 2, 3, 1)).reshape(C2, KC)      # (C2, kh*kw*cin)
    w_t = jnp.pad(w_t, ((0, C2p - C2), (0, 0))).astype(jnp.bfloat16)
    scale = (gamma / jnp.sqrt(running_var + eps)).astype(jnp.float32)
    bias = (beta - running_mean * scale).astype(jnp.float32)
    scale = jnp.pad(scale, (0, C2p - C2)).reshape(C2p, 1)
    bias = jnp.pad(bias, (0, C2p - C2)).reshape(C2p, 1)

    kern = functools.partial(_conv_bn_silu_kernel,
                             k=k, C1=C1, H=H, W=W, Wp=Wp, M=M)

    out = pl.pallas_call(
        kern,
        out_shape=jax.ShapeDtypeStruct((N, C2p, HW), jnp.bfloat16),
        grid_spec=pltpu.PrefetchScalarGridSpec(
            num_scalar_prefetch=0,
            grid=(N, J),
            in_specs=[
                pl.BlockSpec((1, C1, Lpad), lambda n, j: (n, 0, 0)),  # image (resident over j)
                pl.BlockSpec((TCO, KC), lambda n, j: (j, 0)),         # weight tile
                pl.BlockSpec((TCO, 1), lambda n, j: (j, 0)),          # BN scale
                pl.BlockSpec((TCO, 1), lambda n, j: (j, 0)),          # BN bias
            ],
            out_specs=pl.BlockSpec((1, TCO, HW), lambda n, j: (n, j, 0)),
            scratch_shapes=[pltpu.VMEM((KC, M), jnp.bfloat16)],
        ),
        compiler_params=pltpu.CompilerParams(
            # j must stay sequential: the im2col slab built at j==0 is reused.
            dimension_semantics=("parallel", "arbitrary")),
    )(xp, w_t, scale, bias)

    if C2p != C2:
        out = out[:, :C2, :]
    return out.reshape(N, C2, H, W)


# -------------------------------- reference --------------------------------- #
def conv_bn_silu_ref(x, weight, gamma, beta, mean, var, *, k=3, eps=1e-5):
    pad = k // 2
    y = jax.lax.conv_general_dilated(
        x, weight, window_strides=(1, 1), padding=[(pad, pad), (pad, pad)],
        dimension_numbers=("NCHW", "OIHW", "NCHW"))
    scale = gamma / jnp.sqrt(var + eps)
    bias = beta - mean * scale
    y = y * scale[None, :, None, None] + bias[None, :, None, None]
    return y * jax.nn.sigmoid(y)


# ----------------------------------- main ------------------------------------ #
if __name__ == "__main__":
    key = jax.random.PRNGKey(0)
    k_x, k_w, k_g, k_b, k_m, k_v = jax.random.split(key, 6)

    N, C1, C2, H, W, K = 2, 4, 8, 16, 16, 3   # Conv(c1=4, c2=8, k=3)

    x = jax.random.normal(k_x, (N, C1, H, W), dtype=jnp.float32)
    weight = jax.random.normal(k_w, (C2, C1, K, K), dtype=jnp.float32) * 0.1
    gamma = jax.random.normal(k_g, (C2,), dtype=jnp.float32) * 0.1 + 1.0
    beta = jax.random.normal(k_b, (C2,), dtype=jnp.float32) * 0.1
    running_mean = jax.random.normal(k_m, (C2,), dtype=jnp.float32) * 0.1
    running_var = jax.random.uniform(k_v, (C2,), dtype=jnp.float32,
                                     minval=0.5, maxval=1.5)

    out = conv_bn_silu(x, weight, gamma, beta, running_mean, running_var, k=K)
    out = jax.block_until_ready(out)

    ref = conv_bn_silu_ref(x, weight, gamma, beta, running_mean, running_var, k=K)
    ref = jax.block_until_ready(ref)

    assert out.shape == (N, C2, H, W), out.shape
    err = float(jnp.max(jnp.abs(out.astype(jnp.float32) - ref)))
    assert err < 5e-2, err   # bf16 matmul operands + bf16 output

    print("KERNEL_OK")
</pallas_src>

<mosaic_0001>
module attributes {stable_mosaic.version = 11 : i64} {
  func.func @_conv_bn_silu_kernel(%arg0: i32, %arg1: i32, %arg2: memref<1x4x512xbf16, #tpu.memory_space<vmem>>, %arg3: memref<8x36xbf16, #tpu.memory_space<vmem>>, %arg4: memref<8x1xf32, #tpu.memory_space<vmem>>, %arg5: memref<8x1xf32, #tpu.memory_space<vmem>>, %arg6: memref<1x8x256xbf16, #tpu.memory_space<vmem>>, %arg7: memref<36x384xbf16, #tpu.memory_space<vmem>>) attributes {dimension_semantics = [#tpu.dimension_semantics<parallel>, #tpu.dimension_semantics<arbitrary>], iteration_bounds = array<i64: 2, 1>, scalar_prefetch = 0 : i64, scratch_operands = 1 : i64, tpu.core_type = #tpu.core_type<tc>, window_params = [{transform_indices = @transform_0, window_bounds = array<i64: 1, 4, 512>}, {transform_indices = @transform_1, window_bounds = array<i64: 8, 36>}, {transform_indices = @transform_2, window_bounds = array<i64: 8, 1>}, {transform_indices = @transform_3, window_bounds = array<i64: 8, 1>}, {transform_indices = @transform_4, window_bounds = array<i64: 1, 8, 256>}]} {
    %c0_i32 = arith.constant 0 : i32
    %0 = arith.cmpi eq, %arg1, %c0_i32 : i32
    %1 = arith.extui %0 : i1 to i32
    %c0_i32_0 = arith.constant 0 : i32
    %2 = arith.cmpi ne, %1, %c0_i32_0 : i32
    scf.if %2 {
      %c0_42 = arith.constant 0 : index
      %c0_43 = arith.constant 0 : index
      %c0_44 = arith.constant 0 : index
      %83 = vector.load %arg2[%c0_42, %c0_43, %c0_44] : memref<1x4x512xbf16, #tpu.memory_space<vmem>>, vector<1x4x384xbf16>
      %84 = vector.shape_cast %83 : vector<1x4x384xbf16> to vector<4x384xbf16>
      %c0_45 = arith.constant 0 : index
      %c0_46 = arith.constant 0 : index
      %85 = vector.load %arg7[%c0_45, %c0_46] : memref<36x384xbf16, #tpu.memory_space<vmem>>, vector<4x384xbf16>
      tpu.vector_store %arg7[%c0_45, %c0_46], %84 {strides = array<i32>} : memref<36x384xbf16, #tpu.memory_space<vmem>>, vector<4x384xbf16>,
      %c0_47 = arith.constant 0 : index
      %c0_48 = arith.constant 0 : index
      %c1 = arith.constant 1 : index
      %86 = vector.load %arg2[%c0_47, %c0_48, %c1] : memref<1x4x512xbf16, #tpu.memory_space<vmem>>, vector<1x4x384xbf16>
      %87 = vector.shape_cast %86 : vector<1x4x384xbf16> to vector<4x384xbf16>
      %c4 = arith.constant 4 : index
      %c0_49 = arith.constant 0 : index
      %88 = vector.load %arg7[%c4, %c0_49] : memref<36x384xbf16, #tpu.memory_space<vmem>>, vector<4x384xbf16>
      tpu.vector_store %arg7[%c4, %c0_49], %87 {strides = array<i32>} : memref<36x384xbf16, #tpu.memory_space<vmem>>, vector<4x384xbf16>,
      %c0_50 = arith.constant 0 : index
      %c0_51 = arith.constant 0 : index
      %c2 = arith.constant 2 : index
      %89 = vector.load %arg2[%c0_50, %c0_51, %c2] : memref<1x4x512xbf16, #tpu.memory_space<vmem>>, vector<1x4x384xbf16>
      %90 = vector.shape_cast %89 : vector<1x4x384xbf16> to vector<4x384xbf16>
      %c8 = arith.constant 8 : index
      %c0_52 = arith.constant 0 : index
      %91 = vector.load %arg7[%c8, %c0_52] : memref<36x384xbf16, #tpu.memory_space<vmem>>, vector<4x384xbf16>
      tpu.vector_store %arg7[%c8, %c0_52], %90 {strides = array<i32>} : memref<36x384xbf16, #tpu.memory_space<vmem>>, vector<4x384xbf16>,
      %c0_53 = arith.constant 0 : index
      %c0_54 = arith.constant 0 : index
      %c24 = arith.constant 24 : index
      %92 = vector.load %arg2[%c0_53, %c0_54, %c24] : memref<1x4x512xbf16, #tpu.memory_space<vmem>>, vector<1x4x384xbf16>
      %93 = vector.shape_cast %92 : vector<1x4x384xbf16> to vector<4x384xbf16>
      %c12 = arith.constant 12 : index
      %c0_55 = arith.constant 0 : index
      %94 = vector.load %arg7[%c12, %c0_55] : memref<36x384xbf16, #tpu.memory_space<vmem>>, vector<4x384xbf16>
      tpu.vector_store %arg7[%c12, %c0_55], %93 {strides = array<i32>} : memref<36x384xbf16, #tpu.memory_space<vmem>>, vector<4x384xbf16>,
      %c0_56 = arith.constant 0 : index
      %c0_57 = arith.constant 0 : index
      %c25 = arith.constant 25 : index
      %95 = vector.load %arg2[%c0_56, %c0_57, %c25] : memref<1x4x512xbf16, #tpu.memory_space<vmem>>, vector<1x4x384xbf16>
      %96 = vector.shape_cast %95 : vector<1x4x384xbf16> to vector<4x384xbf16>
      %c16_58 = arith.constant 16 : index
      %c0_59 = arith.constant 0 : index
      %97 = vector.load %arg7[%c16_58, %c0_59] : memref<36x384xbf16, #tpu.memory_space<vmem>>, vector<4x384xbf16>
      tpu.vector_store %arg7[%c16_58, %c0_59], %96 {strides = array<i32>} : memref<36x384xbf16, #tpu.memory_space<vmem>>, vector<4x384xbf16>,
      %c0_60 = arith.constant 0 : index
      %c0_61 = arith.constant 0 : index
      %c26 = arith.constant 26 : index
      %98 = vector.load %arg2[%c0_60, %c0_61, %c26] : memref<1x4x512xbf16, #tpu.memory_space<vmem>>, vector<1x4x384xbf16>
      %99 = vector.shape_cast %98 : vector<1x4x384xbf16> to vector<4x384xbf16>
      %c20 = arith.constant 20 : index
      %c0_62 = arith.constant 0 : index
      %100 = vector.load %arg7[%c20, %c0_62] : memref<36x384xbf16, #tpu.memory_space<vmem>>, vector<4x384xbf16>
      tpu.vector_store %arg7[%c20, %c0_62], %99 {strides = array<i32>} : memref<36x384xbf16, #tpu.memory_space<vmem>>, vector<4x384xbf16>,
      %c0_63 = arith.constant 0 : index
      %c0_64 = arith.constant 0 : index
      %c48_65 = arith.constant 48 : index
      %101 = vector.load %arg2[%c0_63, %c0_64, %c48_65] : memref<1x4x512xbf16, #tpu.memory_space<vmem>>, vector<1x4x384xbf16>
      %102 = vector.shape_cast %101 : vector<1x4x384xbf16> to vector<4x384xbf16>
      %c24_66 = arith.constant 24 : index
      %c0_67 = arith.constant 0 : index
      %103 = vector.load %arg7[%c24_66, %c0_67] : memref<36x384xbf16, #tpu.memory_space<vmem>>, vector<4x384xbf16>
      tpu.vector_store %arg7[%c24_66, %c0_67], %102 {strides = array<i32>} : memref<36x384xbf16, #tpu.memory_space<vmem>>, vector<4x384xbf16>,
      %c0_68 = arith.constant 0 : index
      %c0_69 = arith.constant 0 : index
      %c49 = arith.constant 49 : index
      %104 = vector.load %arg2[%c0_68, %c0_69, %c49] : memref<1x4x512xbf16, #tpu.memory_space<vmem>>, vector<1x4x384xbf16>
      %105 = vector.shape_cast %104 : vector<1x4x384xbf16> to vector<4x384xbf16>
      %c28 = arith.constant 28 : index
      %c0_70 = arith.constant 0 : index
      %106 = vector.load %arg7[%c28, %c0_70] : memref<36x384xbf16, #tpu.memory_space<vmem>>, vector<4x384xbf16>
      tpu.vector_store %arg7[%c28, %c0_70], %105 {strides = array<i32>} : memref<36x384xbf16, #tpu.memory_space<vmem>>, vector<4x384xbf16>,
      %c0_71 = arith.constant 0 : index
      %c0_72 = arith.constant 0 : index
      %c50 = arith.constant 50 : index
      %107 = vector.load %arg2[%c0_71, %c0_72, %c50] : memref<1x4x512xbf16, #tpu.memory_space<vmem>>, vector<1x4x384xbf16>
      %108 = vector.shape_cast %107 : vector<1x4x384xbf16> to vector<4x384xbf16>
      %c32_73 = arith.constant 32 : index
      %c0_74 = arith.constant 0 : index
      %109 = vector.load %arg7[%c32_73, %c0_74] : memref<36x384xbf16, #tpu.memory_space<vmem>>, vector<4x384xbf16>
      tpu.vector_store %arg7[%c32_73, %c0_74], %108 {strides = array<i32>} : memref<36x384xbf16, #tpu.memory_space<vmem>>, vector<4x384xbf16>,
    } else {
    }
    %c0 = arith.constant 0 : index
    %c0_1 = arith.constant 0 : index
    %3 = vector.load %arg3[%c0, %c0_1] : memref<8x36xbf16, #tpu.memory_space<vmem>>, vector<8x36xbf16>
    %c0_2 = arith.constant 0 : index
    %c0_3 = arith.constant 0 : index
    %4 = vector.load %arg7[%c0_2, %c0_3] : memref<36x384xbf16, #tpu.memory_space<vmem>>, vector<36x384xbf16>
    %cst = arith.constant dense<0.000000e+00> : vector<8x384xf32>
    %5 = tpu.matmul %3, %4, %cst {dimension_numbers = #tpu.dot_dimension_numbers<[1], [0], [0], [1], [0, 0, 1, 1], [], []>} : vector<8x36xbf16>, vector<36x384xbf16>, vector<8x384xf32> -> vector<8x384xf32>
    %c0_4 = arith.constant 0 : index
    %c0_5 = arith.constant 0 : index
    %6 = vector.load %arg4[%c0_4, %c0_5] : memref<8x1xf32, #tpu.memory_space<vmem>>, vector<8x1xf32>
    %7 = vector.broadcast %6 : vector<8x1xf32> to vector<8x384xf32>
    %8 = arith.mulf %5, %7 : vector<8x384xf32>
    %c0_6 = arith.constant 0 : index
    %c0_7 = arith.constant 0 : index
    %9 = vector.load %arg5[%c0_6, %c0_7] : memref<8x1xf32, #tpu.memory_space<vmem>>, vector<8x1xf32>
    %10 = vector.broadcast %9 : vector<8x1xf32> to vector<8x384xf32>
    %11 = arith.addf %8, %10 : vector<8x384xf32>
    %12 = arith.negf %11 : vector<8x384xf32>
    %13 = math.exp %12 : vector<8x384xf32>
    %cst_8 = arith.constant 1.000000e+00 : f32
    %14 = vector.broadcast %cst_8 : f32 to vector<8x384xf32>
    %15 = arith.addf %14, %13 : vector<8x384xf32>
    %16 = arith.divf %14, %15 : vector<8x384xf32>
    %17 = arith.mulf %11, %16 : vector<8x384xf32>
    %18 = arith.truncf %17 : vector<8x384xf32> to vector<8x384xbf16>
    %19 = vector.extract_strided_slice %18 {offsets = [0, 0], sizes = [8, 16], strides = [1, 1]} : vector<8x384xbf16> to vector<8x16xbf16>
    %c0_9 = arith.constant 0 : index
    %c0_10 = arith.constant 0 : index
    %c0_11 = arith.constant 0 : index
    %20 = vector.load %arg6[%c0_9, %c0_10, %c0_11] : memref<1x8x256xbf16, #tpu.memory_space<vmem>>, vector<1x8x16xbf16>
    %21 = vector.shape_cast %20 : vector<1x8x16xbf16> to vector<8x16xbf16>
    %22 = vector.shape_cast %19 : vector<8x16xbf16> to vector<1x8x16xbf16>
    tpu.vector_store %arg6[%c0_9, %c0_10, %c0_11], %22 {strides = array<i32>} : memref<1x8x256xbf16, #tpu.memory_space<vmem>>, vector<1x8x16xbf16>,
    %23 = vector.extract_strided_slice %18 {offsets = [0, 24], sizes = [8, 16], strides = [1, 1]} : vector<8x384xbf16> to vector<8x16xbf16>
    %c0_12 = arith.constant 0 : index
    %c0_13 = arith.constant 0 : index
    %c16 = arith.constant 16 : index
    %24 = vector.load %arg6[%c0_12, %c0_13, %c16] : memref<1x8x256xbf16, #tpu.memory_space<vmem>>, vector<1x8x16xbf16>
    %25 = vector.shape_cast %24 : vector<1x8x16xbf16> to vector<8x16xbf16>
    %26 = vector.shape_cast %23 : vector<8x16xbf16> to vector<1x8x16xbf16>
    tpu.vector_store %arg6[%c0_12, %c0_13, %c16], %26 {strides = array<i32>} : memref<1x8x256xbf16, #tpu.memory_space<vmem>>, vector<1x8x16xbf16>,
    %27 = vector.extract_strided_slice %18 {offsets = [0, 48], sizes = [8, 16], strides = [1, 1]} : vector<8x384xbf16> to vector<8x16xbf16>
    %c0_14 = arith.constant 0 : index
    %c0_15 = arith.constant 0 : index
    %c32 = arith.constant 32 : index
    %28 = vector.load %arg6[%c0_14, %c0_15, %c32] : memref<1x8x256xbf16, #tpu.memory_space<vmem>>, vector<1x8x16xbf16>
    %29 = vector.shape_cast %28 : vector<1x8x16xbf16> to vector<8x16xbf16>
    %30 = vector.shape_cast %27 : vector<8x16xbf16> to vector<1x8x16xbf16>
    tpu.vector_store %arg6[%c0_14, %c0_15, %c32], %30 {strides = array<i32>} : memref<1x8x256xbf16, #tpu.memory_space<vmem>>, vector<1x8x16xbf16>,
    %31 = vector.extract_strided_slice %18 {offsets = [0, 72], sizes = [8, 16], strides = [1, 1]} : vector<8x384xbf16> to vector<8x16xbf16>
    %c0_16 = arith.constant 0 : index
    %c0_17 = arith.constant 0 : index
    %c48 = arith.constant 48 : index
    %32 = vector.load %arg6[%c0_16, %c0_17, %c48] : memref<1x8x256xbf16, #tpu.memory_space<vmem>>, vector<1x8x16xbf16>
    %33 = vector.shape_cast %32 : vector<1x8x16xbf16> to vector<8x16xbf16>
    %34 = vector.shape_cast %31 : vector<8x16xbf16> to vector<1x8x16xbf16>
    tpu.vector_store %arg6[%c0_16, %c0_17, %c48], %34 {strides = array<i32>} : memref<1x8x256xbf16, #tpu.memory_space<vmem>>, vector<1x8x16xbf16>,
    %35 = vector.extract_strided_slice %18 {offsets = [0, 96], sizes = [8, 16], strides = [1, 1]} : vector<8x384xbf16> to vector<8x16xbf16>
    %c0_18 = arith.constant 0 : index
    %c0_19 = arith.constant 0 : index
    %c64 = arith.constant 64 : index
    %36 = vector.load %arg6[%c0_18, %c0_19, %c64] : memref<1x8x256xbf16, #tpu.memory_space<vmem>>, vector<1x8x16xbf16>
    %37 = vector.shape_cast %36 : vector<1x8x16xbf16> to vector<8x16xbf16>
    %38 = vector.shape_cast %35 : vector<8x16xbf16> to vector<1x8x16xbf16>
    tpu.vector_store %arg6[%c0_18, %c0_19, %c64], %38 {strides = array<i32>} : memref<1x8x256xbf16, #tpu.memory_space<vmem>>, vector<1x8x16xbf16>,
    %39 = vector.extract_strided_slice %18 {offsets = [0, 120], sizes = [8, 16], strides = [1, 1]} : vector<8x384xbf16> to vector<8x16xbf16>
    %c0_20 = arith.constant 0 : index
    %c0_21 = arith.constant 0 : index
    %c80 = arith.constant 80 : index
    %40 = vector.load %arg6[%c0_20, %c0_21, %c80] : memref<1x8x256xbf16, #tpu.memory_space<vmem>>, vector<1x8x16xbf16>
    %41 = vector.shape_cast %40 : vector<1x8x16xbf16> to vector<8x16xbf16>
    %42 = vector.shape_cast %39 : vector<8x16xbf16> to vector<1x8x16xbf16>
    tpu.vector_store %arg6[%c0_20, %c0_21, %c80], %42 {strides = array<i32>} : memref<1x8x256xbf16, #tpu.memory_space<vmem>>, vector<1x8x16xbf16>,
    %43 = vector.extract_strided_slice %18 {offsets = [0, 144], sizes = [8, 16], strides = [1, 1]} : vector<8x384xbf16> to vector<8x16xbf16>
    %c0_22 = arith.constant 0 : index
    %c0_23 = arith.constant 0 : index
    %c96 = arith.constant 96 : index
    %44 = vector.load %arg6[%c0_22, %c0_23, %c96] : memref<1x8x256xbf16, #tpu.memory_space<vmem>>, vector<1x8x16xbf16>
    %45 = vector.shape_cast %44 : vector<1x8x16xbf16> to vector<8x16xbf16>
    %46 = vector.shape_cast %43 : vector<8x16xbf16> to vector<1x8x16xbf16>
    tpu.vector_store %arg6[%c0_22, %c0_23, %c96], %46 {strides = array<i32>} : memref<1x8x256xbf16, #tpu.memory_space<vmem>>, vector<1x8x16xbf16>,
    %47 = vector.extract_strided_slice %18 {offsets = [0, 168], sizes = [8, 16], strides = [1, 1]} : vector<8x384xbf16> to vector<8x16xbf16>
    %c0_24 = arith.constant 0 : index
    %c0_25 = arith.constant 0 : index
    %c112 = arith.constant 112 : index
    %48 = vector.load %arg6[%c0_24, %c0_25, %c112] : memref<1x8x256xbf16, #tpu.memory_space<vmem>>, vector<1x8x16xbf16>
    %49 = vector.shape_cast %48 : vector<1x8x16xbf16> to vector<8x16xbf16>
    %50 = vector.shape_cast %47 : vector<8x16xbf16> to vector<1x8x16xbf16>
    tpu.vector_store %arg6[%c0_24, %c0_25, %c112], %50 {strides = array<i32>} : memref<1x8x256xbf16, #tpu.memory_space<vmem>>, vector<1x8x16xbf16>,
    %51 = vector.extract_strided_slice %18 {offsets = [0, 192], sizes = [8, 16], strides = [1, 1]} : vector<8x384xbf16> to vector<8x16xbf16>
    %c0_26 = arith.constant 0 : index
    %c0_27 = arith.constant 0 : index
    %c128 = arith.constant 128 : index
    %52 = vector.load %arg6[%c0_26, %c0_27, %c128] : memref<1x8x256xbf16, #tpu.memory_space<vmem>>, vector<1x8x16xbf16>
    %53 = vector.shape_cast %52 : vector<1x8x16xbf16> to vector<8x16xbf16>
    %54 = vector.shape_cast %51 : vector<8x16xbf16> to vector<1x8x16xbf16>
    tpu.vector_store %arg6[%c0_26, %c0_27, %c128], %54 {strides = array<i32>} : memref<1x8x256xbf16, #tpu.memory_space<vmem>>, vector<1x8x16xbf16>,
    %55 = vector.extract_strided_slice %18 {offsets = [0, 216], sizes = [8, 16], strides = [1, 1]} : vector<8x384xbf16> to vector<8x16xbf16>
    %c0_28 = arith.constant 0 : index
    %c0_29 = arith.constant 0 : index
    %c144 = arith.constant 144 : index
    %56 = vector.load %arg6[%c0_28, %c0_29, %c144] : memref<1x8x256xbf16, #tpu.memory_space<vmem>>, vector<1x8x16xbf16>
    %57 = vector.shape_cast %56 : vector<1x8x16xbf16> to vector<8x16xbf16>
    %58 = vector.shape_cast %55 : vector<8x16xbf16> to vector<1x8x16xbf16>
    tpu.vector_store %arg6[%c0_28, %c0_29, %c144], %58 {strides = array<i32>} : memref<1x8x256xbf16, #tpu.memory_space<vmem>>, vector<1x8x16xbf16>,
    %59 = vector.extract_strided_slice %18 {offsets = [0, 240], sizes = [8, 16], strides = [1, 1]} : vector<8x384xbf16> to vector<8x16xbf16>
    %c0_30 = arith.constant 0 : index
    %c0_31 = arith.constant 0 : index
    %c160 = arith.constant 160 : index
    %60 = vector.load %arg6[%c0_30, %c0_31, %c160] : memref<1x8x256xbf16, #tpu.memory_space<vmem>>, vector<1x8x16xbf16>
    %61 = vector.shape_cast %60 : vector<1x8x16xbf16> to vector<8x16xbf16>
    %62 = vector.shape_cast %59 : vector<8x16xbf16> to vector<1x8x16xbf16>
    tpu.vector_store %arg6[%c0_30, %c0_31, %c160], %62 {strides = array<i32>} : memref<1x8x256xbf16, #tpu.memory_space<vmem>>, vector<1x8x16xbf16>,
    %63 = vector.extract_strided_slice %18 {offsets = [0, 264], sizes = [8, 16], strides = [1, 1]} : vector<8x384xbf16> to vector<8x16xbf16>
    %c0_32 = arith.constant 0 : index
    %c0_33 = arith.constant 0 : index
    %c176 = arith.constant 176 : index
    %64 = vector.load %arg6[%c0_32, %c0_33, %c176] : memref<1x8x256xbf16, #tpu.memory_space<vmem>>, vector<1x8x16xbf16>
    %65 = vector.shape_cast %64 : vector<1x8x16xbf16> to vector<8x16xbf16>
    %66 = vector.shape_cast %63 : vector<8x16xbf16> to vector<1x8x16xbf16>
    tpu.vector_store %arg6[%c0_32, %c0_33, %c176], %66 {strides = array<i32>} : memref<1x8x256xbf16, #tpu.memory_space<vmem>>, vector<1x8x16xbf16>,
    %67 = vector.extract_strided_slice %18 {offsets = [0, 288], sizes = [8, 16], strides = [1, 1]} : vector<8x384xbf16> to vector<8x16xbf16>
    %c0_34 = arith.constant 0 : index
    %c0_35 = arith.constant 0 : index
    %c192 = arith.constant 192 : index
    %68 = vector.load %arg6[%c0_34, %c0_35, %c192] : memref<1x8x256xbf16, #tpu.memory_space<vmem>>, vector<1x8x16xbf16>
    %69 = vector.shape_cast %68 : vector<1x8x16xbf16> to vector<8x16xbf16>
    %70 = vector.shape_cast %67 : vector<8x16xbf16> to vector<1x8x16xbf16>
    tpu.vector_store %arg6[%c0_34, %c0_35, %c192], %70 {strides = array<i32>} : memref<1x8x256xbf16, #tpu.memory_space<vmem>>, vector<1x8x16xbf16>,
    %71 = vector.extract_strided_slice %18 {offsets = [0, 312], sizes = [8, 16], strides = [1, 1]} : vector<8x384xbf16> to vector<8x16xbf16>
    %c0_36 = arith.constant 0 : index
    %c0_37 = arith.constant 0 : index
    %c208 = arith.constant 208 : index
    %72 = vector.load %arg6[%c0_36, %c0_37, %c208] : memref<1x8x256xbf16, #tpu.memory_space<vmem>>, vector<1x8x16xbf16>
    %73 = vector.shape_cast %72 : vector<1x8x16xbf16> to vector<8x16xbf16>
    %74 = vector.shape_cast %71 : vector<8x16xbf16> to vector<1x8x16xbf16>
    tpu.vector_store %arg6[%c0_36, %c0_37, %c208], %74 {strides = array<i32>} : memref<1x8x256xbf16, #tpu.memory_space<vmem>>, vector<1x8x16xbf16>,
    %75 = vector.extract_strided_slice %18 {offsets = [0, 336], sizes = [8, 16], strides = [1, 1]} : vector<8x384xbf16> to vector<8x16xbf16>
    %c0_38 = arith.constant 0 : index
    %c0_39 = arith.constant 0 : index
    %c224 = arith.constant 224 : index
    %76 = vector.load %arg6[%c0_38, %c0_39, %c224] : memref<1x8x256xbf16, #tpu.memory_space<vmem>>, vector<1x8x16xbf16>
    %77 = vector.shape_cast %76 : vector<1x8x16xbf16> to vector<8x16xbf16>
    %78 = vector.shape_cast %75 : vector<8x16xbf16> to vector<1x8x16xbf16>
    tpu.vector_store %arg6[%c0_38, %c0_39, %c224], %78 {strides = array<i32>} : memref<1x8x256xbf16, #tpu.memory_space<vmem>>, vector<1x8x16xbf16>,
    %79 = vector.extract_strided_slice %18 {offsets = [0, 360], sizes = [8, 16], strides = [1, 1]} : vector<8x384xbf16> to vector<8x16xbf16>
    %c0_40 = arith.constant 0 : index
    %c0_41 = arith.constant 0 : index
    %c240 = arith.constant 240 : index
    %80 = vector.load %arg6[%c0_40, %c0_41, %c240] : memref<1x8x256xbf16, #tpu.memory_space<vmem>>, vector<1x8x16xbf16>
    %81 = vector.shape_cast %80 : vector<1x8x16xbf16> to vector<8x16xbf16>
    %82 = vector.shape_cast %79 : vector<8x16xbf16> to vector<1x8x16xbf16>
    tpu.vector_store %arg6[%c0_40, %c0_41, %c240], %82 {strides = array<i32>} : memref<1x8x256xbf16, #tpu.memory_space<vmem>>, vector<1x8x16xbf16>,
    return
  }
  func.func @transform_0(%arg0: i32, %arg1: i32) -> (i32, i32, i32) {
    %c0_i32 = arith.constant 0 : i32
    %c0_i32_0 = arith.constant 0 : i32
    %c0_i32_1 = arith.constant 0 : i32
    return %arg0, %c0_i32, %c0_i32_0 : i32, i32, i32
  }
  func.func @transform_1(%arg0: i32, %arg1: i32) -> (i32, i32) {
    %c0_i32 = arith.constant 0 : i32
    %c0_i32_0 = arith.constant 0 : i32
    return %arg1, %c0_i32 : i32, i32
  }
  func.func @transform_2(%arg0: i32, %arg1: i32) -> (i32, i32) {
    %c0_i32 = arith.constant 0 : i32
    %c0_i32_0 = arith.constant 0 : i32
    return %arg1, %c0_i32 : i32, i32
  }
  func.func @transform_3(%arg0: i32, %arg1: i32) -> (i32, i32) {
    %c0_i32 = arith.constant 0 : i32
    %c0_i32_0 = arith.constant 0 : i32
    return %arg1, %c0_i32 : i32, i32
  }
  func.func @transform_4(%arg0: i32, %arg1: i32) -> (i32, i32, i32) {
    %c0_i32 = arith.constant 0 : i32
    %c0_i32_0 = arith.constant 0 : i32
    return %arg0, %arg1, %c0_i32 : i32, i32, i32
  }
}

</mosaic_0001>

<llo_original>
// kernel: tpu_custom_call.1
$region0: #{tpu_custom_call.1}
  #allocation0 [shape = 'u32[]', space=smem, size = 0x4, offset = 0x4, fixed_abs, tag = 'smem constant byte address 0x4 - core index']
  #allocation1 [shape = 'u32[72,128]{1,0:T(1,128)}', space=vmem, size = 0x9000, scoped, tag = 'internal scratch']
  #allocation2 [shape = 'bf16[36,384]{1,0:T(8,128)(2,1)}', space=vmem, size = 0x7800, scoped, tag = 'scratch operand']
  %s0 = inlined_call_operand.vmem [shape: bf16[2,4,512], index: 0, kind: input, shape index: {}]
  %s1 = inlined_call_operand.hbm [shape: bf16[8,36], index: 1, kind: input, shape index: {}]
  %s2 = inlined_call_operand.vmem [shape: f32[8,1], index: 2, kind: input, shape index: {}]
  %s3 = inlined_call_operand.vmem [shape: f32[8,1], index: 3, kind: input, shape index: {}]
  %s4 = inlined_call_operand.hbm [shape: bf16[2,8,256], index: 4, kind: output, shape index: {}]
  %s5 = sld [smem:[#allocation0]]
  $region57: #{tpu_custom_call.1} parent=0
    _
  %s7 = ssub.s32 1, %s5
  %s8 = scalar_select 0, %s7, %s5
  $region1: #{tpu_custom_call.1} parent=0
    #allocation3 [shape = 'u8[2048]{0}', space=vmem, size = 0x800, scoped, tag = 'input window, operand 1, single buffered']
    #allocation4 [shape = 's32[2]{0}', space=sflag, size = 0x8, scoped, tag = 'scoped memory for tpu_custom_call.1']
    #allocation5 [shape = 's32[2]{0}', space=sflag, size = 0x8, scoped, tag = 'scoped memory for tpu_custom_call.1']
    #allocation6 [shape = 'u8[8192]{0}', space=vmem, size = 0x2000, scoped, tag = 'output window, operand 0']
    %9 = vsyncpa [#allocation4], 0
    %10 = vsyncpa [#allocation5], 0
    %s11 = scalar_lea.sflag [#allocation5], 1
    %12 = vsyncpa %s11, 0
    loop: start=0, step=1, limit=4
    $region2: #{tpu_custom_call.1} parent=1 // loop_pre_header
      _
    $region3: #{tpu_custom_call.1} parent=1 // loop_header
      %s14 = sphi 0, %s18
      %p15 = scmp.ge.s32.totalorder %s14, 4
      %s21 = sphi 0, %s33
      %s22 = sphi 0, %s29
      %s23 = sphi 0, %s21
      %s24 = sphi 0, %s22
      %s25 = sphi 0, %s23
      %s26 = sphi 0, %s24
      %s36 = sphi 0, %s38
      %s39 = sphi 0, %s36
      %s40 = sphi 0, %s39
      %s56 = sphi 0, %s40
      %s62 = sphi 0, %s64
      %s65 = sphi 0, %s62
      %s66 = sphi 0, %s65
      %s82 = sphi 0, %s66
      %s88 = sphi 0, %s90
      %s91 = sphi 0, %s88
      %s92 = sphi 0, %s91
      %s108 = sphi 0, %s92
      %s114 = sphi 0, %s116
      %s117 = sphi 0, %s114
      %s118 = sphi 0, %s117
      %s134 = sphi 0, %s118
      %s142 = sphi 0, %s144
      %s145 = sphi 0, %s142
      %s146 = sphi 0, %s145
      %s162 = sphi 0, %s146
    $region4: #{tpu_custom_call.1} parent=1 // loop_header_branch
      %17 = sbr.rel (%p15) target = $region8
    $region5: #{tpu_custom_call.1} parent=1 // loop_body
      %s19 = ssub.s32 %s14, 1
      %s20 = ssub.s32 %s14, 2
      %s27 = sadd.s32 1, %s22
      %p28 = scmp.ge.s32.totalorder %s27, 1
      %s29 = scalar_select %p28, 0, %s27
      %s30 = sadd.s32 1, %s21
      %s31 = scalar_select %p28, %s30, %s21
      %p32 = scmp.ge.s32.totalorder %s31, 2
      %s33 = scalar_select %p32, 0, %s31
      %s34 = ssub.s32 %s21, %s33
      %p35 = scmp.eq.s32.totalorder %s34, 0
      %s37 = sadd.s32 %s36, 1
      %s38 = scalar_select %p35, %s36, %s37
      %p41 = pneg %p35
      %p42 = scmp.eq.s32.totalorder %s14, 1
      %p43 = por %p41, %p42
      %p44 = scmp.ne.s32.totalorder %s36, %s39
      %p45 = scmp.eq.s32.totalorder %s14, 0
      %p46 = por %p44, %p45
      %p47 = scmp.ne.s32.totalorder %s36, %s39
      %p48 = scmp.eq.s32.totalorder %s19, 1
      %p49 = por %p47, %p48
      %p50 = scmp.ne.s32.totalorder %s39, %s40
      %p51 = scmp.eq.s32.totalorder %s19, 0
      %p52 = por %p50, %p51
      %p53 = scmp.ne.s32.totalorder %s39, %s40
      %p54 = scmp.eq.s32.totalorder %s20, 1
      %p55 = por %p53, %p54
      %p57 = scmp.ne.s32.totalorder %s40, %s56
      %p58 = scmp.eq.s32.totalorder %s20, 0
      %p59 = por %p57, %p58
      %s60 = ssub.s32 %s22, %s29
      %p61 = scmp.eq.s32.totalorder %s60, 0
      %s63 = sadd.s32 %s62, 1
      %s64 = scalar_select %p61, %s62, %s63
      %p67 = pneg %p61
      %p68 = scmp.eq.s32.totalorder %s14, 1
      %p69 = por %p67, %p68
      %p70 = scmp.ne.s32.totalorder %s62, %s65
      %p71 = scmp.eq.s32.totalorder %s14, 0
      %p72 = por %p70, %p71
      %p73 = scmp.ne.s32.totalorder %s62, %s65
      %p74 = scmp.eq.s32.totalorder %s19, 1
      %p75 = por %p73, %p74
      %p76 = scmp.ne.s32.totalorder %s65, %s66
      %p77 = scmp.eq.s32.totalorder %s19, 0
      %p78 = por %p76, %p77
      %p79 = scmp.ne.s32.totalorder %s65, %s66
      %p80 = scmp.eq.s32.totalorder %s20, 1
      %p81 = por %p79, %p80
      %p83 = scmp.ne.s32.totalorder %s66, %s82
      %p84 = scmp.eq.s32.totalorder %s20, 0
      %p85 = por %p83, %p84
      %s86 = ssub.s32 %s22, %s29
      %p87 = scmp.eq.s32.totalorder %s86, 0
      %s89 = sadd.s32 %s88, 1
      %s90 = scalar_select %p87, %s88, %s89
      %p93 = pneg %p87
      %p94 = scmp.eq.s32.totalorder %s14, 1
      %p95 = por %p93, %p94
      %p96 = scmp.ne.s32.totalorder %s88, %s91
      %p97 = scmp.eq.s32.totalorder %s14, 0
      %p98 = por %p96, %p97
      %p99 = scmp.ne.s32.totalorder %s88, %s91
      %p100 = scmp.eq.s32.totalorder %s19, 1
      %p101 = por %p99, %p100
      %p102 = scmp.ne.s32.totalorder %s91, %s92
      %p103 = scmp.eq.s32.totalorder %s19, 0
      %p104 = por %p102, %p103
      %p105 = scmp.ne.s32.totalorder %s91, %s92
      %p106 = scmp.eq.s32.totalorder %s20, 1
      %p107 = por %p105, %p106
      %p109 = scmp.ne.s32.totalorder %s92, %s108
      %p110 = scmp.eq.s32.totalorder %s20, 0
      %p111 = por %p109, %p110
      %s112 = ssub.s32 %s22, %s29
      %p113 = scmp.eq.s32.totalorder %s112, 0
      %s115 = sadd.s32 %s114, 1
      %s116 = scalar_select %p113, %s114, %s115
      %p119 = pneg %p113
      %p120 = scmp.eq.s32.totalorder %s14, 1
      %p121 = por %p119, %p120
      %p122 = scmp.ne.s32.totalorder %s114, %s117
      %p123 = scmp.eq.s32.totalorder %s14, 0
      %p124 = por %p122, %p123
      %p125 = scmp.ne.s32.totalorder %s114, %s117
      %p126 = scmp.eq.s32.totalorder %s19, 1
      %p127 = por %p125, %p126
      %p128 = scmp.ne.s32.totalorder %s117, %s118
      %p129 = scmp.eq.s32.totalorder %s19, 0
      %p130 = por %p128, %p129
      %p131 = scmp.ne.s32.totalorder %s117, %s118
      %p132 = scmp.eq.s32.totalorder %s20, 1
      %p133 = por %p131, %p132
      %p135 = scmp.ne.s32.totalorder %s118, %s134
      %p136 = scmp.eq.s32.totalorder %s20, 0
      %p137 = por %p135, %p136
      %s138 = ssub.s32 %s21, %s33
      %s139 = ssub.s32 %s22, %s29
      %s140 = sor.u32 %s138, %s139
      %p141 = scmp.eq.s32.totalorder %s140, 0
      %s143 = sadd.s32 %s142, 1
      %s144 = scalar_select %p141, %s142, %s143
      %p147 = pneg %p141
      %p148 = scmp.eq.s32.totalorder %s14, 1
      %p149 = por %p147, %p148
      %p150 = scmp.ne.s32.totalorder %s142, %s145
      %p151 = scmp.eq.s32.totalorder %s14, 0
      %p152 = por %p150, %p151
      %p153 = scmp.ne.s32.totalorder %s142, %s145
      %p154 = scmp.eq.s32.totalorder %s19, 1
      %p155 = por %p153, %p154
      %p156 = scmp.ne.s32.totalorder %s145, %s146
      %p157 = scmp.eq.s32.totalorder %s19, 0
      %p158 = por %p156, %p157
      %p159 = scmp.ne.s32.totalorder %s145, %s146
      %p160 = scmp.eq.s32.totalorder %s20, 1
      %p161 = por %p159, %p160
      %p163 = scmp.ne.s32.totalorder %s146, %s162
      %p164 = scmp.eq.s32.totalorder %s20, 0
      %p165 = por %p163, %p164
      %p166 = scmp.le.s32.totalorder 1, %s14
      %p167 = scmp.lt.s32.totalorder %s14, 3
      %p168 = pnand %p166, %p167
      %p169 = pneg %p168
      // Predicated region
      $region9: #{tpu_custom_call.1} parent=5 // pred_check
        _
      $region10: #{tpu_custom_call.1} parent=5 // pred_check_branch
        %171 = sbr.rel (%p168) target = $region12
      $region11: #{tpu_custom_call.1} parent=5 // pred_region
        %s172 = ssub.s32 %s14, 1
        // Predicated region
        $region13: #{tpu_custom_call.1} parent=11 // pred_check
          %p173 = pneg %p78
        $region14: #{tpu_custom_call.1} parent=11 // pred_check_branch
          %175 = sbr.rel (%p173) target = $region16
        $region15: #{tpu_custom_call.1} parent=11 // pred_region
          %177 = vsyncadd [#allocation4], 0
          %s178 = smul.addr %s24, 4
          %s179 = scalar_lea.hbm %s1, %s178
          %s181 = sshll.u32 %s179, 4
          %s182 = int_to_ptr.hbm [resolvable:$true] %s181
          %s183 = sshll.u32 [#allocation3], 4
          %s184 = int_to_ptr.vmem [resolvable:$true] %s183
          %186 = dma.hbm_to_vmem [thread:$0]  %s182, 64, %s184, [#allocation4]
        $region16: #{tpu_custom_call.1} parent=11 // pred_fallthru
          _
        // Predicated region
        $region17: #{tpu_custom_call.1} parent=11 // pred_check
          %p187 = pneg %p104
        $region18: #{tpu_custom_call.1} parent=11 // pred_check_branch
          %189 = sbr.rel (%p187) target = $region20
        $region19: #{tpu_custom_call.1} parent=11 // pred_region
          %p190 = scmp.lt.s32.totalorder %s24, 0
          %s191 = scalar_select %p190, %s24, 0
          %s192 = smul.addr %s191, 8
          %s193 = scalar_lea.vmem %s2, %s192
        $region20: #{tpu_custom_call.1} parent=11 // pred_fallthru
          _
        // Predicated region
        $region21: #{tpu_custom_call.1} parent=11 // pred_check
          %p194 = pneg %p130
        $region22: #{tpu_custom_call.1} parent=11 // pred_check_branch
          %196 = sbr.rel (%p194) target = $region24
        $region23: #{tpu_custom_call.1} parent=11 // pred_region
          %p197 = scmp.lt.s32.totalorder %s24, 0
          %s198 = scalar_select %p197, %s24, 0
          %s199 = smul.addr %s198, 8
          %s200 = scalar_lea.vmem %s3, %s199
        $region24: #{tpu_custom_call.1} parent=11 // pred_fallthru
          _
      $region12: #{tpu_custom_call.1} parent=5 // pred_fallthru
        _
      %p201 = scmp.lt.s32.totalorder %s14, 2
      // Predicated region
      $region25: #{tpu_custom_call.1} parent=5 // pred_check
        %p202 = pneg %p201
      $region26: #{tpu_custom_call.1} parent=5 // pred_check_branch
        %204 = sbr.rel (%p202) target = $region28
      $region27: #{tpu_custom_call.1} parent=5 // pred_region
        // Predicated region
        $region29: #{tpu_custom_call.1} parent=27 // pred_check
          %p205 = pneg %p46
        $region30: #{tpu_custom_call.1} parent=27 // pred_check_branch
          %207 = sbr.rel (%p205) target = $region32
        $region31: #{tpu_custom_call.1} parent=27 // pred_region
          %p208 = scmp.lt.s32.totalorder %s21, 1
          %s209 = scalar_select %p208, %s21, 1
          %s210 = smul.addr %s209, 4
          %s211 = smul.addr %s210, 2
          %s212 = scalar_lea.vmem %s0, %s211
        $region32: #{tpu_custom_call.1} parent=27 // pred_fallthru
          _
      $region28: #{tpu_custom_call.1} parent=5 // pred_fallthru
        _
      %p213 = scmp.le.s32.totalorder 1, %s14
      %p214 = scmp.lt.s32.totalorder %s14, 3
      %p215 = pnand %p213, %p214
      %p216 = pneg %p215
      // Predicated region
      $region33: #{tpu_custom_call.1} parent=5 // pred_check
        _
      $region34: #{tpu_custom_call.1} parent=5 // pred_check_branch
        %218 = sbr.rel (%p215) target = $region36
      $region35: #{tpu_custom_call.1} parent=5 // pred_region
        %s219 = ssub.s32 %s14, 1
        // Predicated region
        $region37: #{tpu_custom_call.1} parent=35 // pred_check
          %p220 = pneg %p78
        $region38: #{tpu_custom_call.1} parent=35 // pred_check_branch
          %222 = sbr.rel (%p220) target = $region40
        $region39: #{tpu_custom_call.1} parent=35 // pred_region
          %224 = dma.done [#allocation4], 64
        $region40: #{tpu_custom_call.1} parent=35 // pred_fallthru
          _
        %p225 = scmp.lt.s32.totalorder %s23, 1
        %s226 = scalar_select %p225, %s23, 1
        %s227 = smul.addr %s226, 4
        %s228 = smul.addr %s227, 2
        %s229 = scalar_lea.vmem %s0, %s228
        %p230 = pneg %p52
        %p231 = pneg %p49
        %p232 = pneg %p78
        %p233 = pneg %p75
        %p234 = scmp.lt.s32.totalorder %s24, 0
        %s235 = scalar_select %p234, %s24, 0
        %s236 = smul.addr %s235, 8
        %s237 = scalar_lea.vmem %s2, %s236
        %p238 = pneg %p104
        %p239 = pneg %p101
        %p240 = scmp.lt.s32.totalorder %s24, 0
        %s241 = scalar_select %p240, %s24, 0
        %s242 = smul.addr %s241, 8
        %s243 = scalar_lea.vmem %s3, %s242
        %p244 = pneg %p130
        %p245 = pneg %p127
        %p246 = pneg %p158
        %p247 = pneg %p155
        %s248 = sand.u32 %s145, 1
        %s249 = scalar_lea.sflag [#allocation5], %s248
        %s250 = sand.u32 %s145, 1
        %s251 = smul.addr %s250, 8
        %s252 = scalar_lea.vmem [#allocation6], %s251
        %p253 = scmp.lt.s32.totalorder %s23, 1
        %s254 = scalar_select %p253, %s23, 1
        %s255 = smul.addr %s254, 4
        %s256 = smul.addr %s255, 2
        %s257 = scalar_lea.vmem %s0, %s256
        %p258 = scmp.lt.s32.totalorder %s24, 0
        %s259 = scalar_select %p258, %s24, 0
        %s260 = smul.addr %s259, 8
        %s261 = scalar_lea.vmem %s2, %s260
        %p262 = scmp.lt.s32.totalorder %s24, 0
        %s263 = scalar_select %p262, %s24, 0
        %s264 = smul.addr %s263, 8
        %s265 = scalar_lea.vmem %s3, %s264
        %p267 = scmp.eq.s32.totalorder %s24, 0
        // Predicated region
        $region41: #{tpu_custom_call.1} parent=35 // pred_check
          %p268 = pneg %p267
        $region42: #{tpu_custom_call.1} parent=35 // pred_check_branch
          %270 = sbr.rel (%p268) target = $region44
        $region43: #{tpu_custom_call.1} parent=35 // pred_region
          %v271 = vld [vmem:[%s257] sm:$0x3f]
          %273 = vst [vmem:[#allocation1] ss:$2 sm:$0xff] %v271
          %v274 = vld.sshfl [vmem:[#allocation1] sm:$0xff pattern:$0x75643120]
          %v275 = vld.sshfl [vmem:[#allocation1 + $0x8] sm:$0xff pattern:$0x75643120]
          %278 = vst [vmem:[#allocation2] sm:$0x33] %v274
          %279 = vst [vmem:[#allocation2 + $0x8] sm:$0x3] %v275
          %v280 = vld [vmem:[%s257] sm:$0xff]
          %s282 = scalar_lea.vmem [#allocation1], 1
          %283 = vst [vmem:[%s282] ss:$2 sm:$0xff] %v280
          %v284 = vld.sshfl [vmem:[#allocation1] sm:$0xff pattern:$0x75643120]
          %v286 = vld.sshfl [vmem:[#allocation1 + $0x8] sm:$0xff pattern:$0x75643120]
          %288 = vrot.lane.b32.xlu0 %v284, 127
          %v289 = vpop.permute.xlu0 %288
          %290 = vrot.lane.b32.xlu0 %v286, 127
          %v291 = vpop.permute.xlu0 %290
          %v292 = vrot.slane %v289, 4
          %v293 = vrot.slane %v291, 4
          %vm294 = vcmask 1043456
          %v295 = vsel %vm294, %v292, %v293
          %vm296 = vcmask 1039360
          %v297 = vsel %vm296, %v289, %v295
          %v298 = vsel %vm296, %v291, %v293
          %301 = vst [vmem:[#allocation2] sm:$0xcc] %v297
          %302 = vst [vmem:[#allocation2 + $0x8] sm:$0xc] %v298
          %v303 = vld [vmem:[%s257] sm:$0xff]
          %305 = vst [vmem:[#allocation1] ss:$2 sm:$0xff] %v303
          %v306 = vld.sshfl [vmem:[#allocation1] sm:$0xff pattern:$0x75643120]
          %v308 = vld.sshfl [vmem:[#allocation1 + $0x8] sm:$0xff pattern:$0x75643120]
          %310 = vrot.lane.b32.xlu0 %v306, 126
          %v311 = vpop.permute.xlu0 %310
          %312 = vrot.lane.b32.xlu0 %v308, 126
          %v313 = vpop.permute.xlu0 %312
          %v314 = vrot.slane %v311, 4
          %v315 = vrot.slane %v313, 4
          %v316 = vsel %vm294, %v314, %v315
          %vm317 = vcmask 1031168
          %v318 = vsel %vm317, %v311, %v316
          %v319 = vsel %vm317, %v313, %v315
          %322 = vst [vmem:[#allocation2 + $0xc] sm:$0x33] %v318
          %323 = vst [vmem:[#allocation2 + $0x14] sm:$0x3] %v319
          %v324 = vld [vmem:[%s257] sm:$0xff]
          %s326 = scalar_lea.vmem [#allocation1], 1
          %327 = vst [vmem:[%s326] ss:$2 sm:$0xff] %v324
          %v328 = vld.sshfl [vmem:[#allocation1] sm:$0xff pattern:$0x75643120]
          %v330 = vld.sshfl [vmem:[#allocation1 + $0x8] sm:$0xff pattern:$0x75643120]
          %332 = vrot.lane.b32.xlu0 %v328, 104
          %v333 = vpop.permute.xlu0 %332
          %334 = vrot.lane.b32.xlu0 %v330, 104
          %v335 = vpop.permute.xlu0 %334
          %v336 = vrot.slane %v333, 4
          %v337 = vrot.slane %v335, 4
          %v338 = vsel %vm294, %v336, %v337
          %vm339 = vcmask 850944
          %v340 = vsel %vm339, %v333, %v338
          %v341 = vsel %vm339, %v335, %v337
          %344 = vst [vmem:[#allocation2 + $0xc] sm:$0xcc] %v340
          %345 = vst [vmem:[#allocation2 + $0x14] sm:$0xc] %v341
          %v346 = vld [vmem:[%s257] sm:$0xff]
          %348 = vst [vmem:[#allocation1] ss:$2 sm:$0xff] %v346
          %v349 = vld.sshfl [vmem:[#allocation1] sm:$0xff pattern:$0x75643120]
          %v351 = vld.sshfl [vmem:[#allocation1 + $0x8] sm:$0xff pattern:$0x75643120]
          %353 = vrot.lane.b32.xlu0 %v349, 103
          %v354 = vpop.permute.xlu0 %353
          %355 = vrot.lane.b32.xlu0 %v351, 103
          %v356 = vpop.permute.xlu0 %355
          %v357 = vrot.slane %v354, 4
          %v358 = vrot.slane %v356, 4
          %v359 = vsel %vm294, %v357, %v358
          %vm360 = vcmask 842752
          %v361 = vsel %vm360, %v354, %v359
          %v362 = vsel %vm360, %v356, %v358
          %365 = vst [vmem:[#allocation2 + $0x18] sm:$0x33] %v361
          %366 = vst [vmem:[#allocation2 + $0x20] sm:$0x3] %v362
          %v367 = vld [vmem:[%s257] sm:$0xff]
          %s369 = scalar_lea.vmem [#allocation1], 1
          %370 = vst [vmem:[%s369] ss:$2 sm:$0xff] %v367
          %v371 = vld.sshfl [vmem:[#allocation1] sm:$0xff pattern:$0x75643120]
          %v373 = vld.sshfl [vmem:[#allocation1 + $0x8] sm:$0xff pattern:$0x75643120]
          %375 = vrot.lane.b32.xlu0 %v371, 102
          %v376 = vpop.permute.xlu0 %375
          %377 = vrot.lane.b32.xlu0 %v373, 102
          %v378 = vpop.permute.xlu0 %377
          %v379 = vrot.slane %v376, 4
          %v380 = vrot.slane %v378, 4
          %v381 = vsel %vm294, %v379, %v380
          %vm382 = vcmask 834560
          %v383 = vsel %vm382, %v376, %v381
          %v384 = vsel %vm382, %v378, %v380
          %387 = vst [vmem:[#allocation2 + $0x18] sm:$0xcc] %v383
          %388 = vst [vmem:[#allocation2 + $0x20] sm:$0xc] %v384
          %v389 = vld [vmem:[%s257] sm:$0xff]
          %391 = vst [vmem:[#allocation1] ss:$2 sm:$0xff] %v389
          %v392 = vld.sshfl [vmem:[#allocation1] sm:$0xff pattern:$0x75643120]
          %v394 = vld.sshfl [vmem:[#allocation1 + $0x8] sm:$0xff pattern:$0x75643120]
          %396 = vrot.lane.b32.xlu0 %v392, 80
          %v397 = vpop.permute.xlu0 %396
          %398 = vrot.lane.b32.xlu0 %v394, 80
          %v399 = vpop.permute.xlu0 %398
          %v400 = vrot.slane %v397, 4
          %v401 = vrot.slane %v399, 4
          %v402 = vsel %vm294, %v400, %v401
          %vm403 = vcmask 654336
          %v404 = vsel %vm403, %v397, %v402
          %v405 = vsel %vm403, %v399, %v401
          %408 = vst [vmem:[#allocation2 + $0x24] sm:$0x33] %v404
          %409 = vst [vmem:[#allocation2 + $0x2c] sm:$0x3] %v405
          %v410 = vld [vmem:[%s257] sm:$0xff]
          %s412 = scalar_lea.vmem [#allocation1], 1
          %413 = vst [vmem:[%s412] ss:$2 sm:$0xff] %v410
          %v414 = vld.sshfl [vmem:[#allocation1] sm:$0xff pattern:$0x75643120]
          %v416 = vld.sshfl [vmem:[#allocation1 + $0x8] sm:$0xff pattern:$0x75643120]
          %418 = vrot.lane.b32.xlu0 %v414, 79
          %v419 = vpop.permute.xlu0 %418
          %420 = vrot.lane.b32.xlu0 %v416, 79
          %v421 = vpop.permute.xlu0 %420
          %v422 = vrot.slane %v419, 4
          %v423 = vrot.slane %v421, 4
          %v424 = vsel %vm294, %v422, %v423
          %vm425 = vcmask 646144
          %v426 = vsel %vm425, %v419, %v424
          %v427 = vsel %vm425, %v421, %v423
          %430 = vst [vmem:[#allocation2 + $0x24] sm:$0xcc] %v426
          %431 = vst [vmem:[#allocation2 + $0x2c] sm:$0xc] %v427
          %v432 = vld [vmem:[%s257] sm:$0xff]
          %434 = vst [vmem:[#allocation1] ss:$2 sm:$0xff] %v432
          %v435 = vld.sshfl [vmem:[#allocation1] sm:$0xff pattern:$0x75643120]
          %v437 = vld.sshfl [vmem:[#allocation1 + $0x8] sm:$0xff pattern:$0x75643120]
          %439 = vrot.lane.b32.xlu0 %v435, 78
          %v440 = vpop.permute.xlu0 %439
          %441 = vrot.lane.b32.xlu0 %v437, 78
          %v442 = vpop.permute.xlu0 %441
          %v443 = vrot.slane %v440, 4
          %v444 = vrot.slane %v442, 4
          %v445 = vsel %vm294, %v443, %v444
          %vm446 = vcmask 637952
          %v447 = vsel %vm446, %v440, %v445
          %v448 = vsel %vm446, %v442, %v444
          %451 = vst [vmem:[#allocation2 + $0x30] sm:$0x33] %v447
          %452 = vst [vmem:[#allocation2 + $0x38] sm:$0x3] %v448
        $region44: #{tpu_custom_call.1} parent=35 // pred_fallthru
          _
        %v453 = vld [vmem:[#allocation3] sm:$0xf]
        %v454 = vld [vmem:[#allocation2] sm:$0xff]
        %v455 = vld [vmem:[#allocation2 + $0x8] sm:$0xf]
        %v456 = vld [vmem:[#allocation2 + $0xc] sm:$0xff]
        %v457 = vld [vmem:[#allocation2 + $0x14] sm:$0xf]
        %v458 = vld [vmem:[#allocation2 + $0x18] sm:$0xff]
        %v459 = vld [vmem:[#allocation2 + $0x20] sm:$0xf]
        %v460 = vld [vmem:[#allocation2 + $0x24] sm:$0xff]
        %v461 = vld [vmem:[#allocation2 + $0x2c] sm:$0xf]
        %v462 = vld [vmem:[#allocation2 + $0x30] sm:$0x33]
        %v463 = vld [vmem:[#allocation2 + $0x38] sm:$0x3]
        %v474 = vunpack.c.l.b16 %v454
        %v475 = vunpack.c.h.b16 %v454
        %v476 = vunpack.c.l.b16 %v455
        %v477 = vunpack.c.l.b16 %v456
        %v478 = vunpack.c.h.b16 %v456
        %v479 = vunpack.c.l.b16 %v457
        %v480 = vunpack.c.l.b16 %v458
        %v481 = vunpack.c.h.b16 %v458
        %v482 = vunpack.c.l.b16 %v459
        %v483 = vunpack.c.l.b16 %v460
        %v484 = vunpack.c.h.b16 %v460
        %v485 = vunpack.c.l.b16 %v461
        %v486 = vunpack.c.l.b16 %v462
        %v487 = vunpack.c.h.b16 %v462
        %v488 = vunpack.c.l.b16 %v463
        %v489 = vpack.c.b16 %v477, %v474
        %v490 = vpack.c.b16 %v478, %v475
        %v491 = vpack.c.b16 %v479, %v476
        %v492 = vpack.c.b16 %v483, %v480
        %v493 = vpack.c.b16 %v484, %v481
        %v494 = vpack.c.b16 %v485, %v482
        %v495 = vpack.c.b16 %v486, %v486
        %v496 = vpack.c.b16 %v487, %v487
        %v497 = vpack.c.b16 %v488, %v488
        %vm504 = vcmask 293888
        %v506 = vsel %vm504, %v453, 0
        %vm508 = vcmask 1041408
        %v510 = vsel %vm508, %v495, 0
        %v513 = vsel %vm508, %v496, 0
        %v516 = vsel %vm508, %v497, 0
        %518 = vmatpush.bf16.msra.mxu0 0
        %519 = vmatpush.bf16.msra.mxu0 0
        %520 = vmatpush.bf16.msra.mxu0 0
        %521 = vmatpush.bf16.msra.mxu0 0
        %522 = vmatpush.bf16.msra.mxu0 0
        %523 = vmatpush.bf16.msra.mxu0 %v510
        %524 = vmatpush.bf16.msra.mxu0 %v492
        %525 = vmatpush.bf16.msra.mxu0 %v489
        %526 = vmatmul.bf16.gmra.mxu0 %v506
        %v527 = vpop.f32.mrf.mxu0
        %v528 = vadd.f32 0.0, %v527
        %v529 = vpop.f32.mrf.mxu0
        %530 = vdwg.mxu0
        %531 = vmatpush.bf16.msra.mxu0 0
        %532 = vmatpush.bf16.msra.mxu0 0
        %533 = vmatpush.bf16.msra.mxu0 0
        %534 = vmatpush.bf16.msra.mxu0 0
        %535 = vmatpush.bf16.msra.mxu0 0
        %536 = vmatpush.bf16.msra.mxu0 %v513
        %537 = vmatpush.bf16.msra.mxu0 %v493
        %538 = vmatpush.bf16.msra.mxu0 %v490
        %539 = vmatmul.bf16.gmra.mxu0 %v506
        %v540 = vpop.f32.mrf.mxu0
        %v541 = vadd.f32 0.0, %v540
        %v542 = vpop.f32.mrf.mxu0
        %543 = vdwg.mxu0
        %544 = vmatpush.bf16.msra.mxu0 0
        %545 = vmatpush.bf16.msra.mxu0 0
        %546 = vmatpush.bf16.msra.mxu0 0
        %547 = vmatpush.bf16.msra.mxu0 0
        %548 = vmatpush.bf16.msra.mxu0 0
        %549 = vmatpush.bf16.msra.mxu0 %v516
        %550 = vmatpush.bf16.msra.mxu0 %v494
        %551 = vmatpush.bf16.msra.mxu0 %v491
        %552 = vmatmul.bf16.gmra.mxu0 %v506
        %v553 = vpop.f32.mrf.mxu0
        %v554 = vadd.f32 0.0, %v553
        %v555 = vpop.f32.mrf.mxu0
        %556 = vdwg.mxu0
        %v557 = vld [vmem:[%s261] sm:$0xff]
        %559 = vset.pattern.permute.xlu0 0
        %560 = vperm.xlu0 %559, %v557
        %v561 = vpop.permute.xlu0 %560
        %v563 = vmul.f32 %v528, %v561
        %v564 = vmul.f32 %v541, %v561
        %v565 = vmul.f32 %v554, %v561
        %v566 = vld [vmem:[%s265] sm:$0xff]
        %568 = vset.pattern.permute.xlu0 0
        %569 = vperm.xlu0 %568, %v566
        %v570 = vpop.permute.xlu0 %569
        %v572 = vadd.f32 %v563, %v570
        %v573 = vadd.f32 %v564, %v570
        %v574 = vadd.f32 %v565, %v570
        %v575 = vxor.u32 %v572, 2147483648
        %v576 = vxor.u32 %v573, 2147483648
        %v577 = vxor.u32 %v574, 2147483648
        %v578 = vmul.f32 %v575, 1.442695
        %v579 = vpow.pop %v578
        %v580 = vmul.f32 %v576, 1.442695
        %v581 = vpow.pop %v580
        %v582 = vmul.f32 %v577, 1.442695
        %v583 = vpow.pop %v582
        %v584 = vadd.f32 %v579, 1.0
        %v585 = vadd.f32 %v581, 1.0
        %v586 = vadd.f32 %v583, 1.0
        %v587 = vrcp.pop %v584
        %v588 = vmul.f32 %v584, %v587
        %v589 = vsub.f32 1.0, %v588
        %v590 = vmul.f32 %v587, %v589
        %v591 = vadd.f32 %v587, %v590
        %vm592 = vweird.f32 %v584
        %vm593 = vweird.f32 %v587
        %vm594 = vmor %vm592, %vm593
        %v595 = vsel %vm594, %v587, %v591
        %v596 = vand.u32 2147483647, %v584
        %vm597 = vcmp.eq.f32.partialorder %v596, 8.507059e+37
        %v598 = vand.u32 %v584, 2147483648
        %v599 = vor.u32 1.1754944e-38, %v598
        %v600 = vsel %vm597, %v599, %v595
        %v601 = vmul.f32 1.0, %v600
        %v602 = vrcp.pop %v585
        %v603 = vmul.f32 %v585, %v602
        %v604 = vsub.f32 1.0, %v603
        %v605 = vmul.f32 %v602, %v604
        %v606 = vadd.f32 %v602, %v605
        %vm607 = vweird.f32 %v585
        %vm608 = vweird.f32 %v602
        %vm609 = vmor %vm607, %vm608
        %v610 = vsel %vm609, %v602, %v606
        %v611 = vand.u32 2147483647, %v585
        %vm612 = vcmp.eq.f32.partialorder %v611, 8.507059e+37
        %v613 = vand.u32 %v585, 2147483648
        %v614 = vor.u32 1.1754944e-38, %v613
        %v615 = vsel %vm612, %v614, %v610
        %v616 = vmul.f32 1.0, %v615
        %v617 = vrcp.pop %v586
        %v618 = vmul.f32 %v586, %v617
        %v619 = vsub.f32 1.0, %v618
        %v620 = vmul.f32 %v617, %v619
        %v621 = vadd.f32 %v617, %v620
        %vm622 = vweird.f32 %v586
        %vm623 = vweird.f32 %v617
        %vm624 = vmor %vm622, %vm623
        %v625 = vsel %vm624, %v617, %v621
        %v626 = vand.u32 2147483647, %v586
        %vm627 = vcmp.eq.f32.partialorder %v626, 8.507059e+37
        %v628 = vand.u32 %v586, 2147483648
        %v629 = vor.u32 1.1754944e-38, %v628
        %v630 = vsel %vm627, %v629, %v625
        %v631 = vmul.f32 1.0, %v630
        %v632 = vmul.f32 %v572, %v601
        %v633 = vmul.f32 %v573, %v616
        %v634 = vmul.f32 %v574, %v631
        %v635 = vpack.c.bf16 %v633, %v632
        %v636 = vpack.c.bf16 %v634, %v634
        %vm637 = vcmask 125952
        %638 = vst.msk [vmem:[%s252] sm:$0xf] %vm637, %v635
        %640 = vrot.lane.b32.xlu0 %v635, 120
        %v641 = vpop.permute.xlu0 %640
        %vm643 = vcmask 257152
        %644 = vst.msk [vmem:[%s252] sm:$0xf] %vm643, %v641
        %645 = vrot.lane.b32.xlu0 %v635, 112
        %v646 = vpop.permute.xlu0 %645
        %vm648 = vcmask 388352
        %649 = vst.msk [vmem:[%s252] sm:$0xf] %vm648, %v646
        %650 = vrot.lane.b32.xlu0 %v635, 104
        %v651 = vpop.permute.xlu0 %650
        %vm653 = vcmask 519552
        %654 = vst.msk [vmem:[%s252] sm:$0xf] %vm653, %v651
        %655 = vrot.lane.b32.xlu0 %v635, 96
        %v656 = vpop.permute.xlu0 %655
        %vm658 = vcmask 650752
        %659 = vst.msk [vmem:[%s252] sm:$0xf] %vm658, %v656
        %660 = vrot.lane.b32.xlu0 %v635, 88
        %v661 = vpop.permute.xlu0 %660
        %v662 = vrot.slane %v661, 4
        %vm663 = vcmask 719872
        %v664 = vsel %vm663, %v661, %v662
        %vm666 = vcmask 781952
        %667 = vst.msk [vmem:[%s252] sm:$0xf] %vm666, %v664
        %v668 = vrot.slane %v646, 4
        %669 = vrot.lane.b32.xlu0 %v668, 96
        %v670 = vpop.permute.xlu0 %669
        %vm672 = vcmask 913152
        %673 = vst.msk [vmem:[%s252] sm:$0xf] %vm672, %v670
        %674 = vrot.lane.b32.xlu0 %v662, 112
        %v675 = vpop.permute.xlu0 %674
        %vm677 = vcmask 1044352
        %678 = vst.msk [vmem:[%s252] sm:$0xf] %vm677, %v675
        %679 = vrot.lane.b32.xlu0 %v635, 64
        %v680 = vpop.permute.xlu0 %679
        %v681 = vrot.slane %v680, 4
        %683 = vst.msk [vmem:[%s252 + $0x4] sm:$0xf] %vm637, %v681
        %684 = vrot.lane.b32.xlu0 %v635, 40
        %v685 = vpop.permute.xlu0 %684
        %v686 = vrot.slane %v685, 4
        %687 = vrot.lane.b32.xlu0 %v686, 16
        %v688 = vpop.permute.xlu0 %687
        %690 = vst.msk [vmem:[%s252 + $0x4] sm:$0xf] %vm643, %v688
        %691 = vrot.lane.b32.xlu0 %v635, 16
        %v692 = vpop.permute.xlu0 %691
        %v693 = vrot.slane %v692, 4
        %694 = vrot.lane.b32.xlu0 %v693, 32
        %v695 = vpop.permute.xlu0 %694
        %697 = vst.msk [vmem:[%s252 + $0x4] sm:$0xf] %vm648, %v695
        %699 = vrot.lane.b32.xlu0 %v636, 40
        %v700 = vpop.permute.xlu0 %699
        %702 = vst.msk [vmem:[%s252 + $0x4] sm:$0xf] %vm653, %v700
        %703 = vrot.lane.b32.xlu0 %v636, 32
        %v704 = vpop.permute.xlu0 %703
        %706 = vst.msk [vmem:[%s252 + $0x4] sm:$0xf] %vm658, %v704
        %707 = vrot.lane.b32.xlu0 %v636, 24
        %v708 = vpop.permute.xlu0 %707
        %710 = vst.msk [vmem:[%s252 + $0x4] sm:$0xf] %vm666, %v708
        %711 = vrot.lane.b32.xlu0 %v636, 16
        %v712 = vpop.permute.xlu0 %711
        %714 = vst.msk [vmem:[%s252 + $0x4] sm:$0xf] %vm672, %v712
        %715 = vrot.lane.b32.xlu0 %v636, 8
        %v716 = vpop.permute.xlu0 %715
        %718 = vst.msk [vmem:[%s252 + $0x4] sm:$0xf] %vm677, %v716
        %s719 = sand.u32 %s145, 1
        %s720 = scalar_lea.sflag [#allocation5], %s719
        %s721 = sand.u32 %s145, 1
        %s722 = smul.addr %s721, 8
        %s723 = scalar_lea.vmem [#allocation6], %s722
        // Predicated region
        $region45: #{tpu_custom_call.1} parent=35 // pred_check
          %p724 = pneg %p155
        $region46: #{tpu_custom_call.1} parent=35 // pred_check_branch
          %726 = sbr.rel (%p724) target = $region48
        $region47: #{tpu_custom_call.1} parent=35 // pred_region
          %728 = vsyncadd %s720, 0
          %s729 = smul.addr %s24, 2
          %s730 = smul.addr %s23, 2
          %s731 = sadd.s32 %s729, %s730
          %s732 = smul.addr %s731, 4
          %s733 = scalar_lea.hbm %s4, %s732
          %s735 = sshll.u32 %s723, 4
          %s736 = int_to_ptr.vmem [resolvable:$true] %s735
          %s737 = sshll.u32 %s733, 4
          %s738 = int_to_ptr.hbm [resolvable:$true] %s737
          %740 = dma.vmem_to_hbm [thread:$0]  %s736, 128, %s738, %s720
        $region48: #{tpu_custom_call.1} parent=35 // pred_fallthru
          _
      $region36: #{tpu_custom_call.1} parent=5 // pred_fallthru
        _
      %p741 = scmp.le.s32.totalorder 2, %s14
      // Predicated region
      $region49: #{tpu_custom_call.1} parent=5 // pred_check
        %p742 = pneg %p741
      $region50: #{tpu_custom_call.1} parent=5 // pred_check_branch
        %744 = sbr.rel (%p742) target = $region52
      $region51: #{tpu_custom_call.1} parent=5 // pred_region
        %s745 = ssub.s32 %s14, 2
        // Predicated region
        $region53: #{tpu_custom_call.1} parent=51 // pred_check
          %p746 = pneg %p161
        $region54: #{tpu_custom_call.1} parent=51 // pred_check_branch
          %748 = sbr.rel (%p746) target = $region56
        $region55: #{tpu_custom_call.1} parent=51 // pred_region
          %s749 = sand.u32 %s146, 1
          %s750 = scalar_lea.sflag [#allocation5], %s749
          %s751 = sand.u32 %s146, 1
          %s752 = smul.addr %s751, 8
          %s753 = scalar_lea.vmem [#allocation6], %s752
          %755 = dma.done %s750, 128
        $region56: #{tpu_custom_call.1} parent=51 // pred_fallthru
          _
      $region52: #{tpu_custom_call.1} parent=5 // pred_fallthru
        _
    $region6: #{tpu_custom_call.1} parent=1 // loop_footer
      %s18 = sadd.s32 1, %s14
    $region7: #{tpu_custom_call.1} parent=1 // loop_footer_branch
      %13 = sbr.rel target = $region3
    $region8: #{tpu_custom_call.1} parent=1 // loop_exit
      _
    %756 = vsyncpa [#allocation4], 1
    %s757 = scalar_lea.sflag [#allocation4], 1
    %758 = vsyncpa %s757, 1
    %759 = vsyncpa [#allocation5], 1
    %s760 = scalar_lea.sflag [#allocation5], 1
    %761 = vsyncpa %s760, 1

</llo_original>
